<compile_context>
chip_gen: v6e
topology: v6e:2x2x1
jax: 0.10.0
libtpu: 0.0.40
codegen_flags: <defaults>
</compile_context>

<pallas_src>
import functools
import math

import jax
import jax.numpy as jnp
from jax.experimental import pallas as pl
from jax.experimental.pallas import tpu as pltpu


def _ohem_ce_pixel_kernel(logits_ref, labels_ref, loss_ref, stats_ref, *,
                          ignore_lb, log_thresh, hw, tile_hw):
    """Per-pixel CE + per-tile hard-example partials.

    logits_ref: (C, T) native dtype   labels_ref: (1, T) int32
    loss_ref:   (1, T) f32            stats_ref:  (1, 128) f32
    """
    logits = logits_ref[...].astype(jnp.float32)                  # (C, T)
    labels = labels_ref[...]                                      # (1, T)
    C = logits.shape[0]

    # numerically stable log-sum-exp over the channel (sublane) axis
    m = jnp.max(logits, axis=0, keepdims=True)                    # (1, T)
    lse = jnp.log(jnp.sum(jnp.exp(logits - m), axis=0, keepdims=True)) + m
    # TODO(synk): on v7x, if the EUP slot binds, compute exp(logits - m) in bf16
    # (inputs are <= 0) with f32 accumulation; skip on v5e (no bf16 EUP).

    # gather the target-class logit: (C,1) iota broadcast against (1,T) labels
    # (avoids a full (C,T) int32 slab in VMEM)
    ch = jax.lax.broadcasted_iota(jnp.int32, (C, 1), 0)           # (C, 1)
    picked = jnp.sum(jnp.where(ch == labels, logits, 0.0),
                     axis=0, keepdims=True)                       # (1, T)

    # validity: not ignore_index AND inside the real HW extent (tail-tile mask;
    # the grid uses cdiv so the last tile may overrun HW)
    lane = jax.lax.broadcasted_iota(jnp.int32, labels.shape, 1)   # (1, T)
    in_range = (pl.program_id(1) * tile_hw + lane) < hw
    valid = (labels != ignore_lb) & in_range

    loss = jnp.where(valid, lse - picked, 0.0)                    # (1, T) f32
    loss_ref[...] = loss.astype(loss_ref.dtype)

    # per-tile partials for the hard branch: lane0 = sum(loss>th), lane1 = count
    hard = valid & (loss > log_thresh)
    hard_sum = jnp.sum(jnp.where(hard, loss, 0.0), axis=1, keepdims=True)   # (1,1)
    hard_cnt = jnp.sum(hard.astype(jnp.float32), axis=1, keepdims=True)     # (1,1)
    slot = jax.lax.broadcasted_iota(jnp.int32, stats_ref.shape, 1)          # (1,128)
    stats_ref[...] = jnp.where(
        slot == 0, hard_sum, jnp.where(slot == 1, hard_cnt, 0.0)
    ).astype(stats_ref.dtype)


def _vmem_capacity_bytes():
    try:
        cap = getattr(pltpu.get_tpu_info(), "vmem_capacity_bytes", None)
        if cap:
            return int(cap)
    except Exception:
        pass
    return 64 << 20  # conservative default (v7x physical VMEM)


def _choose_tile(C, HW, itemsize, vmem_budget_bytes, max_tile=32768):
    """Largest multiple of 128 (<= max_tile) whose full VMEM footprint fits.

    per-lane bytes = double-buffered logits block + ~3 f32 C-slab in-kernel
    temporaries (upcast, exp, select) + labels/loss blocks + slack.
    """
    per_lane = 2 * C * itemsize + 3 * C * 4 + 2 * 4 + 2 * 4 + 8
    cap = min(max_tile, vmem_budget_bytes // per_lane, HW)
    # keep >= ~4 tiles along HW so both v7x TensorCores get work
    cap = min(cap, max(128, (HW // 4) // 128 * 128))
    return max(128, (cap // 128) * 128)


def ohem_ce_loss(logits_nchw, labels_nhw, thresh, n_min, ignore_lb=255):
    """Matches OhemCELoss.forward(logits, labels).

    logits_nchw: (N, C, H, W) float (f32 or bf16 — streamed in native dtype)
    labels_nhw:  (N, H, W) int (values in [0, C) or ignore_lb)
    thresh / n_min / ignore_lb: static (module-constructor) parameters.
    """
    N, C, H, W = logits_nchw.shape
    HW = H * W
    P = N * HW

    # free, contiguous reshape — logits stream in native NCHW order and dtype
    logits = logits_nchw.reshape(N, C, HW)
    labels = labels_nhw.reshape(N, 1, HW).astype(jnp.int32)
    # TODO(synk): stream labels as uint8 (saves ~3 B/pixel) once the caller
    # provides a narrow int dtype; an explicit cast here costs its own HBM pass.

    vmem_cap = _vmem_capacity_bytes()
    vmem_limit = int(min(vmem_cap // 2, 64 << 20))
    budget = int(min(vmem_cap // 4, 16 << 20))
    tile_hw = _choose_tile(C, HW, jnp.dtype(logits.dtype).itemsize, budget)
    num_tiles = -(-HW // tile_hw)

    log_thresh = float(-math.log(float(thresh)))  # static, like the torch module

    kernel = functools.partial(
        _ohem_ce_pixel_kernel, ignore_lb=int(ignore_lb),
        log_thresh=log_thresh, hw=HW, tile_hw=tile_hw)

    per_pixel, stats = pl.pallas_call(
        kernel,
        out_shape=(
            jax.ShapeDtypeStruct((N, 1, HW), jnp.float32),
            jax.ShapeDtypeStruct((N, 1, num_tiles * 128), jnp.float32),
        ),
        grid_spec=pltpu.PrefetchScalarGridSpec(
            num_scalar_prefetch=0,
            grid=(N, num_tiles),
            in_specs=[
                # batch dim squeezed; kernel sees (C, tile_hw) / (1, tile_hw)
                pl.BlockSpec((None, C, tile_hw), lambda n, i: (n, 0, i)),
                pl.BlockSpec((None, 1, tile_hw), lambda n, i: (n, 0, i)),
            ],
            out_specs=[
                pl.BlockSpec((None, 1, tile_hw), lambda n, i: (n, 0, i)),
                pl.BlockSpec((None, 1, 128), lambda n, i: (n, 0, i)),
            ],
        ),
        compiler_params=pltpu.CompilerParams(
            dimension_semantics=("parallel", "parallel"),
            vmem_limit_bytes=vmem_limit),
    )(logits, labels)

    per_pixel = per_pixel.reshape(P)                       # (P,) f32, no padding
    stats = stats.reshape(N, num_tiles, 128)
    hard_sum = jnp.sum(stats[:, :, 0])                     # f32
    hard_cnt = jnp.sum(stats[:, :, 1].astype(jnp.int32))   # exact integer count

    # PyTorch would IndexError if n_min >= P; clamp statically (and guard n_min=0).
    n_min = max(1, min(int(n_min), P - 1))

    # sorted_desc[n_min] > thresh  <=>  count(loss > thresh) > n_min
    cond = hard_cnt > n_min

    def _hard_branch(_):
        return hard_sum / jnp.maximum(hard_cnt, 1).astype(jnp.float32)

    def _topn_branch(pp):
        # Exact mean of the top n_min losses without a full sort: binary-search
        # the n_min-th largest value on the f32 bit pattern (valid because CE
        # losses are non-negative finite floats).
        bits = jax.lax.bitcast_convert_type(pp, jnp.int32)

        def body(_, state):
            lo, hi = state
            mid = lo + (hi - lo + 1) // 2
            ok = jnp.sum((bits >= mid).astype(jnp.int32)) >= n_min
            return jnp.where(ok, mid, lo), jnp.where(ok, hi, mid - 1)

        lo, _ = jax.lax.fori_loop(0, 32, body, (jnp.int32(0), jnp.max(bits)))
        vk = jax.lax.bitcast_convert_type(lo, jnp.float32)   # n_min-th largest
        gt = pp > vk
        sum_gt = jnp.sum(jnp.where(gt, pp, 0.0))
        cnt_gt = jnp.sum(gt.astype(jnp.int32))
        topn_sum = sum_gt + (n_min - cnt_gt).astype(jnp.float32) * vk
        return topn_sum / jnp.float32(n_min)

    return jax.lax.cond(cond, _hard_branch, _topn_branch, per_pixel)


def _reference(logits, labels, thresh, n_min, ignore_lb):
    # pure-JAX replica of the torch module for a correctness check
    N, C, H, W = logits.shape
    logp = jax.nn.log_softmax(logits.astype(jnp.float32), axis=1)
    safe = jnp.clip(labels, 0, C - 1).astype(jnp.int32)
    picked = jnp.take_along_axis(logp, safe[:, None, :, :], axis=1)[:, 0]
    loss = jnp.where(labels == ignore_lb, 0.0, -picked).reshape(-1)
    srt = jnp.sort(loss)[::-1]
    lt = -jnp.log(jnp.float32(thresh))
    cond = srt[n_min] > lt
    hard = loss > lt
    mean_hard = jnp.sum(jnp.where(hard, loss, 0.0)) / jnp.maximum(jnp.sum(hard), 1)
    mean_topn = jnp.mean(srt[:n_min])
    return jnp.where(cond, mean_hard, mean_topn)


if __name__ == "__main__":
    key = jax.random.PRNGKey(0)
    k_logit, k_label, k_ignore = jax.random.split(key, 3)

    N, C, H, W = 2, 4, 16, 16
    ignore_lb = 255
    thresh = 0.7
    n_min = 64  # < N*H*W

    logits = jax.random.normal(k_logit, (N, C, H, W), dtype=jnp.float32) * 3.0
    labels = jax.random.randint(k_label, (N, H, W), 0, C, dtype=jnp.int32)
    ignore_mask = jax.random.uniform(k_ignore, (N, H, W)) < 0.1
    labels = jnp.where(ignore_mask, ignore_lb, labels)

    fn = jax.jit(functools.partial(ohem_ce_loss, thresh=thresh, n_min=n_min,
                                   ignore_lb=ignore_lb))
    loss = fn(logits, labels)
    jax.block_until_ready(loss)

    ref = _reference(logits, labels, thresh, n_min, ignore_lb)
    assert bool(jnp.isfinite(loss)) and bool(
        jnp.allclose(loss, ref, rtol=1e-4, atol=1e-5)), (loss, ref)
    print("KERNEL_OK")
</pallas_src>

<mosaic_0001>
module attributes {stable_mosaic.version = 11 : i64} {
  func.func @_ohem_ce_pixel_kernel(%arg0: i32, %arg1: i32, %arg2: memref<1x4x128xf32, #tpu.memory_space<vmem>>, %arg3: memref<1x1x128xi32, #tpu.memory_space<vmem>>, %arg4: memref<1x1x128xf32, #tpu.memory_space<vmem>>, %arg5: memref<1x1x128xf32, #tpu.memory_space<vmem>>) attributes {dimension_semantics = [#tpu.dimension_semantics<parallel>, #tpu.dimension_semantics<parallel>], iteration_bounds = array<i64: 2, 2>, scalar_prefetch = 0 : i64, scratch_operands = 0 : i64, tpu.core_type = #tpu.core_type<tc>, window_params = [{transform_indices = @transform_0, window_bounds = array<i64: 1, 4, 128>}, {transform_indices = @transform_1, window_bounds = array<i64: 1, 1, 128>}, {transform_indices = @transform_2, window_bounds = array<i64: 1, 1, 128>}, {transform_indices = @transform_3, window_bounds = array<i64: 1, 1, 128>}]} {
    %c0 = arith.constant 0 : index
    %c0_0 = arith.constant 0 : index
    %c0_1 = arith.constant 0 : index
    %0 = vector.load %arg2[%c0, %c0_0, %c0_1] : memref<1x4x128xf32, #tpu.memory_space<vmem>>, vector<1x4x128xf32>
    %1 = vector.shape_cast %0 : vector<1x4x128xf32> to vector<4x128xf32>
    %c0_2 = arith.constant 0 : index
    %c0_3 = arith.constant 0 : index
    %c0_4 = arith.constant 0 : index
    %2 = vector.load %arg3[%c0_2, %c0_3, %c0_4] : memref<1x1x128xi32, #tpu.memory_space<vmem>>, vector<1x1x128xi32>
    %3 = vector.shape_cast %2 : vector<1x1x128xi32> to vector<1x128xi32>
    %cst = arith.constant dense<0xFF800000> : vector<128xf32>
    %4 = vector.multi_reduction <maximumf>, %1, %cst [0] : vector<4x128xf32> to vector<128xf32>
    %5 = vector.shape_cast %4 : vector<128xf32> to vector<1x128xf32>
    %6 = vector.broadcast %5 : vector<1x128xf32> to vector<4x128xf32>
    %7 = arith.subf %1, %6 : vector<4x128xf32>
    %8 = math.exp %7 : vector<4x128xf32>
    %cst_5 = arith.constant dense<0.000000e+00> : vector<128xf32>
    %9 = vector.multi_reduction <add>, %8, %cst_5 [0] : vector<4x128xf32> to vector<128xf32>
    %10 = vector.shape_cast %9 : vector<128xf32> to vector<1x128xf32>
    %11 = math.log %10 : vector<1x128xf32>
    %12 = arith.addf %11, %5 : vector<1x128xf32>
    %13 = tpu.iota {dimensions = array<i32: 0>} : vector<4x1xi32>
    %14 = vector.broadcast %13 : vector<4x1xi32> to vector<4x128xi32>
    %15 = vector.broadcast %3 : vector<1x128xi32> to vector<4x128xi32>
    %16 = arith.cmpi eq, %14, %15 : vector<4x128xi32>
    %cst_6 = arith.constant 0.000000e+00 : f32
    %17 = vector.broadcast %cst_6 : f32 to vector<4x128xf32>
    %18 = arith.select %16, %1, %17 : vector<4x128xi1>, vector<4x128xf32>
    %cst_7 = arith.constant dense<0.000000e+00> : vector<128xf32>
    %19 = vector.multi_reduction <add>, %18, %cst_7 [0] : vector<4x128xf32> to vector<128xf32>
    %20 = vector.shape_cast %19 : vector<128xf32> to vector<1x128xf32>
    %21 = tpu.iota {dimensions = array<i32: 1>} : vector<1x128xi32>
    %c128_i32 = arith.constant 128 : i32
    %22 = arith.muli %arg1, %c128_i32 : i32
    %23 = vector.broadcast %22 : i32 to vector<1x128xi32>
    %24 = arith.addi %23, %21 : vector<1x128xi32>
    %c256_i32 = arith.constant 256 : i32
    %25 = vector.broadcast %c256_i32 : i32 to vector<1x128xi32>
    %26 = arith.cmpi slt, %24, %25 : vector<1x128xi32>
    %c255_i32 = arith.constant 255 : i32
    %27 = vector.broadcast %c255_i32 : i32 to vector<1x128xi32>
    %28 = arith.cmpi ne, %3, %27 : vector<1x128xi32>
    %29 = arith.andi %28, %26 : vector<1x128xi1>
    %30 = arith.subf %12, %20 : vector<1x128xf32>
    %cst_8 = arith.constant 0.000000e+00 : f32
    %31 = vector.broadcast %cst_8 : f32 to vector<1x128xf32>
    %32 = arith.select %29, %30, %31 : vector<1x128xi1>, vector<1x128xf32>
    %c0_9 = arith.constant 0 : index
    %c0_10 = arith.constant 0 : index
    %c0_11 = arith.constant 0 : index
    %33 = vector.load %arg4[%c0_9, %c0_10, %c0_11] : memref<1x1x128xf32, #tpu.memory_space<vmem>>, vector<1x1x128xf32>
    %34 = vector.shape_cast %33 : vector<1x1x128xf32> to vector<1x128xf32>
    %35 = vector.shape_cast %32 : vector<1x128xf32> to vector<1x1x128xf32>
    tpu.vector_store %arg4[%c0_9, %c0_10, %c0_11], %35 {strides = array<i32>} : memref<1x1x128xf32, #tpu.memory_space<vmem>>, vector<1x1x128xf32>,
    %cst_12 = arith.constant 0.356674939 : f32
    %36 = vector.broadcast %cst_12 : f32 to vector<1x128xf32>
    %37 = arith.cmpf ogt, %32, %36 : vector<1x128xf32>
    %38 = arith.andi %29, %37 : vector<1x128xi1>
    %cst_13 = arith.constant 0.000000e+00 : f32
    %39 = vector.broadcast %cst_13 : f32 to vector<1x128xf32>
    %40 = arith.select %38, %32, %39 : vector<1x128xi1>, vector<1x128xf32>
    %cst_14 = arith.constant dense<0.000000e+00> : vector<1xf32>
    %41 = vector.multi_reduction <add>, %40, %cst_14 [1] : vector<1x128xf32> to vector<1xf32>
    %42 = vector.shape_cast %41 : vector<1xf32> to vector<1x1xf32>
    %43 = arith.extui %38 : vector<1x128xi1> to vector<1x128xi32>
    %44 = arith.sitofp %43 : vector<1x128xi32> to vector<1x128xf32>
    %cst_15 = arith.constant dense<0.000000e+00> : vector<1xf32>
    %45 = vector.multi_reduction <add>, %44, %cst_15 [1] : vector<1x128xf32> to vector<1xf32>
    %46 = vector.shape_cast %45 : vector<1xf32> to vector<1x1xf32>
    %47 = tpu.iota {dimensions = array<i32: 1>} : vector<1x128xi32>
    %c0_i32 = arith.constant 0 : i32
    %48 = vector.broadcast %c0_i32 : i32 to vector<1x128xi32>
    %49 = arith.cmpi eq, %47, %48 : vector<1x128xi32>
    %c1_i32 = arith.constant 1 : i32
    %50 = vector.broadcast %c1_i32 : i32 to vector<1x128xi32>
    %51 = arith.cmpi eq, %47, %50 : vector<1x128xi32>
    %cst_16 = arith.constant 0.000000e+00 : f32
    %52 = vector.shape_cast %46 : vector<1x1xf32> to vector<1x1xf32>
    %53 = vector.broadcast %52 : vector<1x1xf32> to vector<1x128xf32>
    %54 = vector.broadcast %cst_16 : f32 to vector<1x128xf32>
    %55 = arith.select %51, %53, %54 : vector<1x128xi1>, vector<1x128xf32>
    %56 = vector.shape_cast %42 : vector<1x1xf32> to vector<1x1xf32>
    %57 = vector.broadcast %56 : vector<1x1xf32> to vector<1x128xf32>
    %58 = arith.select %49, %57, %55 : vector<1x128xi1>, vector<1x128xf32>
    %c0_17 = arith.constant 0 : index
    %c0_18 = arith.constant 0 : index
    %c0_19 = arith.constant 0 : index
    %59 = vector.load %arg5[%c0_17, %c0_18, %c0_19] : memref<1x1x128xf32, #tpu.memory_space<vmem>>, vector<1x1x128xf32>
    %60 = vector.shape_cast %59 : vector<1x1x128xf32> to vector<1x128xf32>
    %61 = vector.shape_cast %58 : vector<1x128xf32> to vector<1x1x128xf32>
    tpu.vector_store %arg5[%c0_17, %c0_18, %c0_19], %61 {strides = array<i32>} : memref<1x1x128xf32, #tpu.memory_space<vmem>>, vector<1x1x128xf32>,
    return
  }
  func.func @transform_0(%arg0: i32, %arg1: i32) -> (i32, i32, i32) {
    %c0_i32 = arith.constant 0 : i32
    %c0_i32_0 = arith.constant 0 : i32
    return %arg0, %c0_i32, %arg1 : i32, i32, i32
  }
  func.func @transform_1(%arg0: i32, %arg1: i32) -> (i32, i32, i32) {
    %c0_i32 = arith.constant 0 : i32
    %c0_i32_0 = arith.constant 0 : i32
    return %arg0, %c0_i32, %arg1 : i32, i32, i32
  }
  func.func @transform_2(%arg0: i32, %arg1: i32) -> (i32, i32, i32) {
    %c0_i32 = arith.constant 0 : i32
    %c0_i32_0 = arith.constant 0 : i32
    return %arg0, %c0_i32, %arg1 : i32, i32, i32
  }
  func.func @transform_3(%arg0: i32, %arg1: i32) -> (i32, i32, i32) {
    %c0_i32 = arith.constant 0 : i32
    %c0_i32_0 = arith.constant 0 : i32
    return %arg0, %c0_i32, %arg1 : i32, i32, i32
  }
}

</mosaic_0001>

<llo_original>
// kernel: ohem_ce_loss.1
$region0: #{ohem_ce_loss.1}
  #allocation0 [shape = 'u32[]', space=smem, size = 0x4, offset = 0x4, fixed_abs, tag = 'smem constant byte address 0x4 - core index']
  #allocation1 [shape = 'u32[144,128]{1,0:T(1,128)}', space=vmem, size = 0x12000, scoped, tag = 'internal scratch']
  %s0 = inlined_call_operand.vmem [shape: f32[2,4,256], index: 0, kind: input, shape index: {}]
  %s1 = inlined_call_operand.vmem [shape: s32[2,1,256], index: 1, kind: input, shape index: {}]
  %s2 = inlined_call_operand.vmem [shape: f32[2,1,256], index: 2, kind: output, shape index: {0}]
  %s3 = inlined_call_operand.vmem [shape: f32[2,1,256], index: 3, kind: output, shape index: {1}]
  %4 = xla_tuple %s2, %s3
  %s5 = sld [smem:[#allocation0]]
  $region49: #{ohem_ce_loss.1} parent=0
    _
  %s7 = ssub.s32 1, %s5
  %s8 = scalar_select 0, %s7, %s5
  loop: start=0, step=1, limit=6
  $region2: #{ohem_ce_loss.1} parent=0 // loop_pre_header
    _
  $region3: #{ohem_ce_loss.1} parent=0 // loop_header
    %s10 = sphi 0, %s14
    %p11 = scmp.ge.s32.totalorder %s10, 6
    %s17 = sphi 0, %s29
    %s18 = sphi 0, %s25
    %s19 = sphi 0, %s17
    %s20 = sphi 0, %s18
    %s21 = sphi 0, %s19
    %s22 = sphi 0, %s20
    %s34 = sphi 0, %s36
    %s37 = sphi 0, %s34
    %s38 = sphi 0, %s37
    %s54 = sphi 0, %s38
    %s62 = sphi 0, %s64
    %s65 = sphi 0, %s62
    %s66 = sphi 0, %s65
    %s82 = sphi 0, %s66
    %s90 = sphi 0, %s92
    %s93 = sphi 0, %s90
    %s94 = sphi 0, %s93
    %s110 = sphi 0, %s94
    %s118 = sphi 0, %s120
    %s121 = sphi 0, %s118
    %s122 = sphi 0, %s121
    %s138 = sphi 0, %s122
  $region4: #{ohem_ce_loss.1} parent=0 // loop_header_branch
    %13 = sbr.rel (%p11) target = $region8
  $region5: #{ohem_ce_loss.1} parent=0 // loop_body
    %s15 = ssub.s32 %s10, 1
    %s16 = ssub.s32 %s10, 2
    %s23 = sadd.s32 1, %s18
    %p24 = scmp.ge.s32.totalorder %s23, 2
    %s25 = scalar_select %p24, 0, %s23
    %s26 = sadd.s32 1, %s17
    %s27 = scalar_select %p24, %s26, %s17
    %p28 = scmp.ge.s32.totalorder %s27, 2
    %s29 = scalar_select %p28, 0, %s27
    %s30 = ssub.s32 %s17, %s29
    %s31 = ssub.s32 %s18, %s25
    %s32 = sor.u32 %s30, %s31
    %p33 = scmp.eq.s32.totalorder %s32, 0
    %s35 = sadd.s32 %s34, 1
    %s36 = scalar_select %p33, %s34, %s35
    %p39 = pneg %p33
    %p40 = scmp.eq.s32.totalorder %s10, 3
    %p41 = por %p39, %p40
    %p42 = scmp.ne.s32.totalorder %s34, %s37
    %p43 = scmp.eq.s32.totalorder %s10, 0
    %p44 = por %p42, %p43
    %p45 = scmp.ne.s32.totalorder %s34, %s37
    %p46 = scmp.eq.s32.totalorder %s15, 3
    %p47 = por %p45, %p46
    %p48 = scmp.ne.s32.totalorder %s37, %s38
    %p49 = scmp.eq.s32.totalorder %s15, 0
    %p50 = por %p48, %p49
    %p51 = scmp.ne.s32.totalorder %s37, %s38
    %p52 = scmp.eq.s32.totalorder %s16, 3
    %p53 = por %p51, %p52
    %p55 = scmp.ne.s32.totalorder %s38, %s54
    %p56 = scmp.eq.s32.totalorder %s16, 0
    %p57 = por %p55, %p56
    %s58 = ssub.s32 %s17, %s29
    %s59 = ssub.s32 %s18, %s25
    %s60 = sor.u32 %s58, %s59
    %p61 = scmp.eq.s32.totalorder %s60, 0
    %s63 = sadd.s32 %s62, 1
    %s64 = scalar_select %p61, %s62, %s63
    %p67 = pneg %p61
    %p68 = scmp.eq.s32.totalorder %s10, 3
    %p69 = por %p67, %p68
    %p70 = scmp.ne.s32.totalorder %s62, %s65
    %p71 = scmp.eq.s32.totalorder %s10, 0
    %p72 = por %p70, %p71
    %p73 = scmp.ne.s32.totalorder %s62, %s65
    %p74 = scmp.eq.s32.totalorder %s15, 3
    %p75 = por %p73, %p74
    %p76 = scmp.ne.s32.totalorder %s65, %s66
    %p77 = scmp.eq.s32.totalorder %s15, 0
    %p78 = por %p76, %p77
    %p79 = scmp.ne.s32.totalorder %s65, %s66
    %p80 = scmp.eq.s32.totalorder %s16, 3
    %p81 = por %p79, %p80
    %p83 = scmp.ne.s32.totalorder %s66, %s82
    %p84 = scmp.eq.s32.totalorder %s16, 0
    %p85 = por %p83, %p84
    %s86 = ssub.s32 %s17, %s29
    %s87 = ssub.s32 %s18, %s25
    %s88 = sor.u32 %s86, %s87
    %p89 = scmp.eq.s32.totalorder %s88, 0
    %s91 = sadd.s32 %s90, 1
    %s92 = scalar_select %p89, %s90, %s91
    %p95 = pneg %p89
    %p96 = scmp.eq.s32.totalorder %s10, 3
    %p97 = por %p95, %p96
    %p98 = scmp.ne.s32.totalorder %s90, %s93
    %p99 = scmp.eq.s32.totalorder %s10, 0
    %p100 = por %p98, %p99
    %p101 = scmp.ne.s32.totalorder %s90, %s93
    %p102 = scmp.eq.s32.totalorder %s15, 3
    %p103 = por %p101, %p102
    %p104 = scmp.ne.s32.totalorder %s93, %s94
    %p105 = scmp.eq.s32.totalorder %s15, 0
    %p106 = por %p104, %p105
    %p107 = scmp.ne.s32.totalorder %s93, %s94
    %p108 = scmp.eq.s32.totalorder %s16, 3
    %p109 = por %p107, %p108
    %p111 = scmp.ne.s32.totalorder %s94, %s110
    %p112 = scmp.eq.s32.totalorder %s16, 0
    %p113 = por %p111, %p112
    %s114 = ssub.s32 %s17, %s29
    %s115 = ssub.s32 %s18, %s25
    %s116 = sor.u32 %s114, %s115
    %p117 = scmp.eq.s32.totalorder %s116, 0
    %s119 = sadd.s32 %s118, 1
    %s120 = scalar_select %p117, %s118, %s119
    %p123 = pneg %p117
    %p124 = scmp.eq.s32.totalorder %s10, 3
    %p125 = por %p123, %p124
    %p126 = scmp.ne.s32.totalorder %s118, %s121
    %p127 = scmp.eq.s32.totalorder %s10, 0
    %p128 = por %p126, %p127
    %p129 = scmp.ne.s32.totalorder %s118, %s121
    %p130 = scmp.eq.s32.totalorder %s15, 3
    %p131 = por %p129, %p130
    %p132 = scmp.ne.s32.totalorder %s121, %s122
    %p133 = scmp.eq.s32.totalorder %s15, 0
    %p134 = por %p132, %p133
    %p135 = scmp.ne.s32.totalorder %s121, %s122
    %p136 = scmp.eq.s32.totalorder %s16, 3
    %p137 = por %p135, %p136
    %p139 = scmp.ne.s32.totalorder %s122, %s138
    %p140 = scmp.eq.s32.totalorder %s16, 0
    %p141 = por %p139, %p140
    %p142 = scmp.le.s32.totalorder 1, %s10
    %p143 = scmp.lt.s32.totalorder %s10, 5
    %p144 = pnand %p142, %p143
    %p145 = pneg %p144
    // Predicated region
    $region9: #{ohem_ce_loss.1} parent=5 // pred_check
      _
    $region10: #{ohem_ce_loss.1} parent=5 // pred_check_branch
      %147 = sbr.rel (%p144) target = $region12
    $region11: #{ohem_ce_loss.1} parent=5 // pred_region
      %s148 = ssub.s32 %s10, 1
    $region12: #{ohem_ce_loss.1} parent=5 // pred_fallthru
      _
    %p149 = scmp.lt.s32.totalorder %s10, 4
    // Predicated region
    $region13: #{ohem_ce_loss.1} parent=5 // pred_check
      %p150 = pneg %p149
    $region14: #{ohem_ce_loss.1} parent=5 // pred_check_branch
      %152 = sbr.rel (%p150) target = $region16
    $region15: #{ohem_ce_loss.1} parent=5 // pred_region
      // Predicated region
      $region17: #{ohem_ce_loss.1} parent=15 // pred_check
        %p153 = pneg %p44
      $region18: #{ohem_ce_loss.1} parent=15 // pred_check_branch
        %155 = sbr.rel (%p153) target = $region20
      $region19: #{ohem_ce_loss.1} parent=15 // pred_region
        %p156 = scmp.lt.s32.totalorder %s17, 1
        %s157 = scalar_select %p156, %s17, 1
        %p158 = scmp.lt.s32.totalorder %s18, 1
        %s159 = scalar_select %p158, %s18, 1
        %s160 = smul.addr %s157, 2
        %s161 = sadd.s32 %s159, %s160
        %s162 = smul.addr %s161, 4
        %s163 = scalar_lea.vmem %s0, %s162
      $region20: #{ohem_ce_loss.1} parent=15 // pred_fallthru
        _
      // Predicated region
      $region21: #{ohem_ce_loss.1} parent=15 // pred_check
        %p164 = pneg %p72
      $region22: #{ohem_ce_loss.1} parent=15 // pred_check_branch
        %166 = sbr.rel (%p164) target = $region24
      $region23: #{ohem_ce_loss.1} parent=15 // pred_region
        %p167 = scmp.lt.s32.totalorder %s17, 1
        %s168 = scalar_select %p167, %s17, 1
        %p169 = scmp.lt.s32.totalorder %s18, 1
        %s170 = scalar_select %p169, %s18, 1
        %s171 = smul.addr %s168, 2
        %s172 = sadd.s32 %s170, %s171
        %s173 = scalar_lea.vmem %s1, %s172
      $region24: #{ohem_ce_loss.1} parent=15 // pred_fallthru
        _
    $region16: #{ohem_ce_loss.1} parent=5 // pred_fallthru
      _
    %p174 = scmp.le.s32.totalorder 1, %s10
    %p175 = scmp.lt.s32.totalorder %s10, 5
    %p176 = pnand %p174, %p175
    %p177 = pneg %p176
    // Predicated region
    $region25: #{ohem_ce_loss.1} parent=5 // pred_check
      _
    $region26: #{ohem_ce_loss.1} parent=5 // pred_check_branch
      %179 = sbr.rel (%p176) target = $region28
    $region27: #{ohem_ce_loss.1} parent=5 // pred_region
      %s180 = ssub.s32 %s10, 1
      %p181 = scmp.lt.s32.totalorder %s19, 1
      %s182 = scalar_select %p181, %s19, 1
      %p183 = scmp.lt.s32.totalorder %s20, 1
      %s184 = scalar_select %p183, %s20, 1
      %s185 = smul.addr %s182, 2
      %s186 = sadd.s32 %s184, %s185
      %s187 = smul.addr %s186, 4
      %s188 = scalar_lea.vmem %s0, %s187
      %p189 = pneg %p50
      %p190 = pneg %p47
      %p191 = scmp.lt.s32.totalorder %s19, 1
      %s192 = scalar_select %p191, %s19, 1
      %p193 = scmp.lt.s32.totalorder %s20, 1
      %s194 = scalar_select %p193, %s20, 1
      %s195 = smul.addr %s192, 2
      %s196 = sadd.s32 %s194, %s195
      %s197 = scalar_lea.vmem %s1, %s196
      %p198 = pneg %p78
      %p199 = pneg %p75
      %p200 = pneg %p106
      %p201 = pneg %p103
      %p202 = scmp.lt.s32.totalorder %s19, 1
      %s203 = scalar_select %p202, %s19, 1
      %p204 = scmp.lt.s32.totalorder %s20, 1
      %s205 = scalar_select %p204, %s20, 1
      %s206 = smul.addr %s203, 2
      %s207 = sadd.s32 %s205, %s206
      %s208 = scalar_lea.vmem %s2, %s207
      %p209 = pneg %p134
      %p210 = pneg %p131
      %p211 = scmp.lt.s32.totalorder %s19, 1
      %s212 = scalar_select %p211, %s19, 1
      %p213 = scmp.lt.s32.totalorder %s20, 1
      %s214 = scalar_select %p213, %s20, 1
      %s215 = smul.addr %s212, 2
      %s216 = sadd.s32 %s214, %s215
      %s217 = scalar_lea.vmem %s3, %s216
      %p218 = scmp.lt.s32.totalorder %s19, 1
      %s219 = scalar_select %p218, %s19, 1
      %p220 = scmp.lt.s32.totalorder %s20, 1
      %s221 = scalar_select %p220, %s20, 1
      %s222 = smul.addr %s219, 2
      %s223 = sadd.s32 %s221, %s222
      %s224 = smul.addr %s223, 4
      %s225 = scalar_lea.vmem %s0, %s224
      %p226 = scmp.lt.s32.totalorder %s19, 1
      %s227 = scalar_select %p226, %s19, 1
      %p228 = scmp.lt.s32.totalorder %s20, 1
      %s229 = scalar_select %p228, %s20, 1
      %s230 = smul.addr %s227, 2
      %s231 = sadd.s32 %s229, %s230
      %s232 = scalar_lea.vmem %s1, %s231
      %p233 = scmp.lt.s32.totalorder %s19, 1
      %s234 = scalar_select %p233, %s19, 1
      %p235 = scmp.lt.s32.totalorder %s20, 1
      %s236 = scalar_select %p235, %s20, 1
      %s237 = smul.addr %s234, 2
      %s238 = sadd.s32 %s236, %s237
      %s239 = scalar_lea.vmem %s2, %s238
      %p240 = scmp.lt.s32.totalorder %s19, 1
      %s241 = scalar_select %p240, %s19, 1
      %p242 = scmp.lt.s32.totalorder %s20, 1
      %s243 = scalar_select %p242, %s20, 1
      %s244 = smul.addr %s241, 2
      %s245 = sadd.s32 %s243, %s244
      %s246 = scalar_lea.vmem %s3, %s245
      %v247 = vld [vmem:[%s225] sm:$0xf]
      %v248 = vld [vmem:[%s232] sm:$0x1]
      %vm249 = vcmask 1043456
      %v250 = vsel %vm249, %v247, -inf
      %v251 = vrot.slane %v250, 4
      %v252 = vmax.f32 %v250, %v251
      %v253 = vrot.slane %v252, 2
      %v254 = vmax.f32 %v252, %v253
      %v255 = vrot.slane %v254, 1
      %v256 = vmax.f32 %v254, %v255
      %v257 = vsub.f32 %v247, %v256
      %v258 = vmul.f32 %v257, 1.442695
      %v259 = vpow.pop %v258
      %v260 = vsel %vm249, %v259, 0.0
      %v261 = vrot.slane %v260, 4
      %v262 = vadd.f32 %v260, %v261
      %v263 = vrot.slane %v262, 2
      %v264 = vadd.f32 %v262, %v263
      %v265 = vrot.slane %v264, 1
      %v266 = vadd.f32 %v264, %v265
      %v267 = vlog2.pop %v266
      %v268 = vmul.f32 %v267, 0.6931472
      %v269 = vadd.f32 %v268, %v256
      %v270 = vlaneseq
      %v271 = vshrl.u32 %v270, 7
      %v272 = vlaneseq
      %v273 = vshrl.u32 %v272, 7
      %v274 = vsub.s32 0, %v273
      %v275 = vrot.slane %v248, %v274
      %vm276 = vcmp.eq.s32.totalorder %v271, %v275
      %v277 = vsel %vm276, %v247, 0.0
      %v278 = vsel %vm249, %v277, 0.0
      %v279 = vrot.slane %v278, 4
      %v280 = vadd.f32 %v278, %v279
      %v281 = vrot.slane %v280, 2
      %v282 = vadd.f32 %v280, %v281
      %v283 = vrot.slane %v282, 1
      %v284 = vadd.f32 %v282, %v283
      %v285 = vlaneseq
      %v286 = vand.u32 %v285, 127
      %s287 = smul.u32 %s20, 128
      %v288 = vstv %s287
      %v289 = vadd.s32 %v288, %v286
      %vm290 = vcmp.lt.s32.totalorder %v289, 256
      %vm291 = vcmp.ne.s32.totalorder %v248, 255
      %vm292 = vmand %vm291, %vm290
      %v293 = vsub.f32 %v269, %v284
      %v294 = vsel %vm292, %v293, 0.0
      %295 = vst [vmem:[%s239] sm:$0x1] %v294
      %vm296 = vcmp.gt.f32.partialorder %v294, 0.35667494
      %vm297 = vmand %vm292, %vm296
      %v298 = vsel %vm297, %v294, 0.0
      %vm299 = vcmask 1040384
      %v300 = vsel %vm299, %v298, 0.0
      %301 = vadd.xlane.f32.xlu0 %v300
      %v302 = vpop.xlane.xlu0 %301
      %v303 = vsel %vm297, 1, 0
      %v304 = vcvt.s32.f32 %v303
      %v305 = vsel %vm299, %v304, 0.0
      %306 = vadd.xlane.f32.xlu0 %v305
      %v307 = vpop.xlane.xlu0 %306
      %vm308 = vcmp.eq.s32.totalorder %v286, 0
      %vm309 = vcmp.eq.s32.totalorder %v286, 1
      %v310 = vsel %vm309, %v307, 0.0
      %v311 = vsel %vm308, %v302, %v310
      %312 = vst [vmem:[%s246] sm:$0x1] %v311
      %p313 = scmp.lt.s32.totalorder %s19, 1
      %s314 = scalar_select %p313, %s19, 1
      %p315 = scmp.lt.s32.totalorder %s20, 1
      %s316 = scalar_select %p315, %s20, 1
      %s317 = smul.addr %s314, 2
      %s318 = sadd.s32 %s316, %s317
      %s319 = scalar_lea.vmem %s2, %s318
      %p320 = scmp.lt.s32.totalorder %s19, 1
      %s321 = scalar_select %p320, %s19, 1
      %p322 = scmp.lt.s32.totalorder %s20, 1
      %s323 = scalar_select %p322, %s20, 1
      %s324 = smul.addr %s321, 2
      %s325 = sadd.s32 %s323, %s324
      %s326 = scalar_lea.vmem %s3, %s325
      // Predicated region
      $region29: #{ohem_ce_loss.1} parent=27 // pred_check
        %p327 = pneg %p103
      $region30: #{ohem_ce_loss.1} parent=27 // pred_check_branch
        %329 = sbr.rel (%p327) target = $region32
      $region31: #{ohem_ce_loss.1} parent=27 // pred_region
        _
      $region32: #{ohem_ce_loss.1} parent=27 // pred_fallthru
        _
      // Predicated region
      $region33: #{ohem_ce_loss.1} parent=27 // pred_check
        %p330 = pneg %p131
      $region34: #{ohem_ce_loss.1} parent=27 // pred_check_branch
        %332 = sbr.rel (%p330) target = $region36
      $region35: #{ohem_ce_loss.1} parent=27 // pred_region
        _
      $region36: #{ohem_ce_loss.1} parent=27 // pred_fallthru
        _
    $region28: #{ohem_ce_loss.1} parent=5 // pred_fallthru
      _
    %p333 = scmp.le.s32.totalorder 2, %s10
    // Predicated region
    $region37: #{ohem_ce_loss.1} parent=5 // pred_check
      %p334 = pneg %p333
    $region38: #{ohem_ce_loss.1} parent=5 // pred_check_branch
      %336 = sbr.rel (%p334) target = $region40
    $region39: #{ohem_ce_loss.1} parent=5 // pred_region
      %s337 = ssub.s32 %s10, 2
      // Predicated region
      $region41: #{ohem_ce_loss.1} parent=39 // pred_check
        %p338 = pneg %p109
      $region42: #{ohem_ce_loss.1} parent=39 // pred_check_branch
        %340 = sbr.rel (%p338) target = $region44
      $region43: #{ohem_ce_loss.1} parent=39 // pred_region
        %p341 = scmp.lt.s32.totalorder %s21, 1
        %s342 = scalar_select %p341, %s21, 1
        %p343 = scmp.lt.s32.totalorder %s22, 1
        %s344 = scalar_select %p343, %s22, 1
        %s345 = smul.addr %s342, 2
        %s346 = sadd.s32 %s344, %s345
        %s347 = scalar_lea.vmem %s2, %s346
      $region44: #{ohem_ce_loss.1} parent=39 // pred_fallthru
        _
      // Predicated region
      $region45: #{ohem_ce_loss.1} parent=39 // pred_check
        %p348 = pneg %p137
      $region46: #{ohem_ce_loss.1} parent=39 // pred_check_branch
        %350 = sbr.rel (%p348) target = $region48
      $region47: #{ohem_ce_loss.1} parent=39 // pred_region
        %p351 = scmp.lt.s32.totalorder %s21, 1
        %s352 = scalar_select %p351, %s21, 1
        %p353 = scmp.lt.s32.totalorder %s22, 1
        %s354 = scalar_select %p353, %s22, 1
        %s355 = smul.addr %s352, 2
        %s356 = sadd.s32 %s354, %s355
        %s357 = scalar_lea.vmem %s3, %s356
      $region48: #{ohem_ce_loss.1} parent=39 // pred_fallthru
        _
    $region40: #{ohem_ce_loss.1} parent=5 // pred_fallthru
      _
  $region6: #{ohem_ce_loss.1} parent=0 // loop_footer
    %s14 = sadd.s32 1, %s10
  $region7: #{ohem_ce_loss.1} parent=0 // loop_footer_branch
    %9 = sbr.rel target = $region3
  $region8: #{ohem_ce_loss.1} parent=0 // loop_exit
    _

</llo_original>
